<compile_context>
chip_gen: v7x
topology: tpu7x:2x2x1
jax: 0.10.0
libtpu: 0.0.40
codegen_flags: <defaults>
</compile_context>

<pallas_src>
import functools
import math

import jax
import jax.numpy as jnp
from jax import lax
from jax.experimental import pallas as pl
from jax.experimental.pallas import tpu as pltpu


def _round_up(x, m):
    return ((x + m - 1) // m) * m


def _vmem_limit_bytes():
    # ~3/4 of physical VMEM, capped at 64 MiB (v5e/v6e: 128 MiB physical -> 64 MiB;
    # v7x: 64 MiB physical -> 48 MiB), leaving headroom for compiler scratch and the
    # double-buffered edge streams.
    try:
        cap = int(pltpu.get_tpu_info().vmem_capacity_bytes)
    except Exception:
        cap = 64 * 1024 * 1024
    return min(64 * 1024 * 1024, (cap * 3) // 4)


# ----------------------------- Kernel 1: node MLP -----------------------------
# h = SiLU(ns @ w1 + b1); o = h @ w2AB + b2AB  where w2AB packs both lane-replicated
# projections [soA(4n) | soB(4n)] into one 8n-wide (256-lane) MXU pass.
def _node_mlp_kernel(x_ref, w1_ref, b1_ref, w2_ref, b2_ref, o_ref):
    h = jnp.dot(x_ref[...], w1_ref[...], preferred_element_type=jnp.float32) + b1_ref[...]
    h = h * jax.nn.sigmoid(h)  # SiLU
    o_ref[...] = jnp.dot(h, w2_ref[...], preferred_element_type=jnp.float32) + b2_ref[...]


# ------------------------- Kernel 2: fused edge kernel -------------------------
# Per edge tile:
#   a = es @ wA + bA        (filter, [ms|gs|gs|gs] layout, f32)
#   b = es @ wB + bB        (filter, [0 |ge|ge|ge] layout, f32)
#   one shared (TE, Np) iota -> onehot_src / onehot_dst (bf16, exact 0/1)
#   gathered = onehot_src @ [soA|soB|nvp]   (single bf16 MXU matmul, f32 accum)
#   msg = cc * (a * g_soA * g_nvp + b * g_soB * evn_pack)   (TE, 4n) f32, lane-dense
#   out += onehot_dst^T @ msg   (transposed-LHS dot_general, bf16 operands, f32 accum)
def _edge_kernel(num_nodes_p, node_size,
                 es_ref, aux_ref, src_ref, dst_ref,
                 wa_ref, ba_ref, wb_ref, bb_ref,
                 slab_ref, out_ref):
    te = es_ref.shape[0]
    n = node_size
    f32 = jnp.float32
    bf16 = jnp.bfloat16

    @pl.when(pl.program_id(1) == 0)
    def _():
        out_ref[...] = jnp.zeros_like(out_ref)

    # filter projections (full 128-lane outputs, no sub-lane slicing), f32
    a = jnp.dot(es_ref[...], wa_ref[...], preferred_element_type=f32) + ba_ref[...]
    b = jnp.dot(es_ref[...], wb_ref[...], preferred_element_type=f32) + bb_ref[...]

    # one shared iota -> both one-hots (0/1 exact in bf16)
    node_ids = lax.broadcasted_iota(jnp.int32, (te, num_nodes_p), 1)
    onehot_src = (node_ids == src_ref[...]).astype(f32).astype(bf16)   # (TE, Np)
    onehot_dst = (node_ids == dst_ref[...]).astype(f32).astype(bf16)   # (TE, Np)

    # fused gather of [soA | soB | nvp]: one bf16 MXU matmul, f32 accumulate
    gathered = jnp.dot(onehot_src, slab_ref[...], preferred_element_type=f32)  # (TE, 12n)
    g_soa = gathered[:, 0 * n:4 * n]
    g_sob = gathered[:, 4 * n:8 * n]
    g_nvp = gathered[:, 8 * n:12 * n]

    # per-edge geometry pack [1 | evn_x | evn_y | evn_z] (each slab n wide) built with an
    # iota/select (replaces the lane-offset concatenate of 32-lane slabs).
    slab_id = lax.broadcasted_iota(jnp.int32, (te, 4 * n), 1) // n
    evn_pack = jnp.where(
        slab_id == 0, jnp.float32(1.0),
        jnp.where(slab_id == 1, aux_ref[:, 1:2],
                  jnp.where(slab_id == 2, aux_ref[:, 2:3], aux_ref[:, 3:4])))

    cc = aux_ref[:, 0:1]                                               # (TE, 1)
    msg = cc * (a * g_soa * g_nvp + b * g_sob * evn_pack)              # (TE, 4n) f32

    # scatter-add into destination nodes: transposed-LHS contraction on the MXU
    out_ref[...] += lax.dot_general(
        onehot_dst, msg.astype(bf16),
        dimension_numbers=(((0,), (0,)), ((), ())),
        preferred_element_type=f32)


# --------------------------------- wrapper ------------------------------------
def painn_interaction(node_state_scalar, node_state_vector, edge_state, edge_vector,
                      edge_distance, edges, params, cutoff,
                      node_tile=1024, edge_tile=256, core_split=2):
    num_nodes, node_size = node_state_scalar.shape
    num_edges, edge_size = edge_state.shape
    n = node_size
    f32 = jnp.float32
    bf16 = jnp.bfloat16
    w1, b1, w2, b2, wf, bf = (params[k] for k in ("w1", "b1", "w2", "b2", "wf", "bf"))

    ns = node_state_scalar.astype(f32)
    nv = node_state_vector.astype(f32)
    es = edge_state.astype(f32)
    vmem_limit = _vmem_limit_bytes()

    # ---- filter packs: A = [ms|gs|gs|gs], B = [0|ge|ge|ge] ----
    w_gs, w_ge, w_ms = wf[:, :n], wf[:, n:2 * n], wf[:, 2 * n:3 * n]
    b_gs, b_ge, b_ms = bf[:, :n], bf[:, n:2 * n], bf[:, 2 * n:3 * n]
    wA = jnp.concatenate([w_ms, w_gs, w_gs, w_gs], axis=1).astype(f32)
    bA = jnp.concatenate([b_ms, b_gs, b_gs, b_gs], axis=1).astype(f32)
    wB = jnp.concatenate([jnp.zeros_like(w_ge), w_ge, w_ge, w_ge], axis=1).astype(f32)
    bB = jnp.concatenate([jnp.zeros_like(b_ge), b_ge, b_ge, b_ge], axis=1).astype(f32)

    # ---- fused second-layer MLP pack [soA(4n) | soB(4n)]; B slab 0 explicitly zeroed ----
    w2_gs, w2_ge, w2_ms = w2[:, :n], w2[:, n:2 * n], w2[:, 2 * n:3 * n]
    b2_gs, b2_ge, b2_ms = b2[:, :n], b2[:, n:2 * n], b2[:, 2 * n:3 * n]
    w2AB = jnp.concatenate([w2_ms, w2_gs, w2_gs, w2_gs,
                            jnp.zeros_like(w2_ge), w2_ge, w2_ge, w2_ge], axis=1).astype(f32)
    b2AB = jnp.concatenate([b2_ms, b2_gs, b2_gs, b2_gs,
                            jnp.zeros_like(b2_ge), b2_ge, b2_ge, b2_ge], axis=1).astype(f32)

    # ---- node MLP (padded / tiled, no silent truncation) ----
    node_tile_eff = min(_round_up(node_tile, 8), _round_up(num_nodes, 8))
    np_pad = _round_up(num_nodes, node_tile_eff)
    ns_p = jnp.pad(ns, ((0, np_pad - num_nodes), (0, 0)))

    soAB = pl.pallas_call(
        _node_mlp_kernel,
        out_shape=jax.ShapeDtypeStruct((np_pad, 8 * n), f32),
        grid_spec=pltpu.PrefetchScalarGridSpec(
            num_scalar_prefetch=0,
            grid=(np_pad // node_tile_eff,),
            in_specs=[
                pl.BlockSpec((node_tile_eff, n), lambda i: (i, 0)),
                pl.BlockSpec((n, n), lambda i: (0, 0)),
                pl.BlockSpec((1, n), lambda i: (0, 0)),
                pl.BlockSpec((n, 8 * n), lambda i: (0, 0)),
                pl.BlockSpec((1, 8 * n), lambda i: (0, 0)),
            ],
            out_specs=pl.BlockSpec((node_tile_eff, 8 * n), lambda i: (i, 0)),
        ),
        compiler_params=pltpu.CompilerParams(
            dimension_semantics=("parallel",),
            vmem_limit_bytes=vmem_limit),
    )(ns_p, w1.astype(f32), b1.astype(f32), w2AB, b2AB)

    # resident gather slab: [soA | soB | nvp], nvp = [1 | nv_x | nv_y | nv_z]; bf16
    ones_nn = jnp.ones((num_nodes, n), f32)
    nvp = jnp.concatenate([ones_nn, nv[:, 0, :], nv[:, 1, :], nv[:, 2, :]], axis=1)
    nvp = jnp.pad(nvp, ((0, np_pad - num_nodes), (0, 0)))
    slab = jnp.concatenate([soAB, nvp], axis=1).astype(bf16)            # (Np, 12n)

    # ---- edge-side glue: cutoff + normalised edge vectors; pad to core_split*tile ----
    edge_tile_eff = min(_round_up(edge_tile, 128), _round_up(num_edges, 128))
    e_pad = _round_up(num_edges, core_split * edge_tile_eff)
    tiles_per_core = (e_pad // edge_tile_eff) // core_split
    pad_e = e_pad - num_edges

    ev = edge_vector.astype(f32)
    ed = edge_distance.astype(f32)
    evn = ev / jnp.maximum(jnp.linalg.norm(ev, axis=1, keepdims=True), 1e-10)
    cc = 0.5 * (jnp.cos(jnp.pi * ed / cutoff) + 1.0) * (ed < cutoff).astype(f32)
    aux = jnp.concatenate([cc, evn], axis=1)                            # (E, 4)

    es_p = jnp.pad(es, ((0, pad_e), (0, 0)))
    aux_p = jnp.pad(aux, ((0, pad_e), (0, 0)))                          # padded cc == 0
    src_p = jnp.pad(edges[:, 0:1].astype(jnp.int32), ((0, pad_e), (0, 0)))
    dst_p = jnp.pad(edges[:, 1:2].astype(jnp.int32), ((0, pad_e), (0, 0)))

    edge_idx = lambda c, i: (c * tiles_per_core + i, 0)
    kernel = functools.partial(_edge_kernel, np_pad, n)
    out_parts = pl.pallas_call(
        kernel,
        out_shape=jax.ShapeDtypeStruct((core_split, np_pad, 4 * n), f32),
        grid_spec=pltpu.PrefetchScalarGridSpec(
            num_scalar_prefetch=0,
            grid=(core_split, tiles_per_core),
            in_specs=[
                pl.BlockSpec((edge_tile_eff, edge_size), edge_idx),
                pl.BlockSpec((edge_tile_eff, 4), edge_idx),
                pl.BlockSpec((edge_tile_eff, 1), edge_idx),
                pl.BlockSpec((edge_tile_eff, 1), edge_idx),
                pl.BlockSpec((edge_size, 4 * n), lambda c, i: (0, 0)),
                pl.BlockSpec((1, 4 * n), lambda c, i: (0, 0)),
                pl.BlockSpec((edge_size, 4 * n), lambda c, i: (0, 0)),
                pl.BlockSpec((1, 4 * n), lambda c, i: (0, 0)),
                pl.BlockSpec((np_pad, 12 * n), lambda c, i: (0, 0)),
            ],
            out_specs=pl.BlockSpec((None, np_pad, 4 * n), lambda c, i: (c, 0, 0)),
        ),
        compiler_params=pltpu.CompilerParams(
            dimension_semantics=("parallel", "arbitrary"),
            vmem_limit_bytes=vmem_limit),
    )(es_p, aux_p, src_p, dst_p, wA, bA, wB, bB, slab)

    # sum per-core partial accumulators, unpack + residual (cheap XLA glue)
    msg = out_parts.sum(axis=0)[:num_nodes]
    new_scalar = ns + msg[:, :n]
    new_vector = nv + msg[:, n:].reshape(num_nodes, 3, n)
    return new_scalar, new_vector


# ---------------------------- pure-JAX reference -------------------------------
def painn_reference(ns, nv, es, ev, ed, edges, params, cutoff):
    w1, b1, w2, b2, wf, bf = (params[k] for k in ("w1", "b1", "w2", "b2", "wf", "bf"))
    evn = ev / jnp.maximum(jnp.linalg.norm(ev, axis=1, keepdims=True), 1e-10)
    fw = es @ wf + bf
    cc = 0.5 * (jnp.cos(jnp.pi * ed / cutoff) + 1.0) * (ed < cutoff).astype(jnp.float32)
    fw = fw * cc
    h = ns @ w1 + b1
    h = h * jax.nn.sigmoid(h)
    so = h @ w2 + b2
    so = so[edges[:, 0]]
    fo = fw * so
    n = ns.shape[1]
    gsv, gev, ms = fo[:, :n], fo[:, n:2 * n], fo[:, 2 * n:]
    msv = nv[edges[:, 0]] * gsv[:, None, :] + gev[:, None, :] * evn[:, :, None]
    mss = jnp.zeros_like(ns).at[edges[:, 1]].add(ms)
    msvv = jnp.zeros_like(nv).at[edges[:, 1]].add(msv)
    return ns + mss, nv + msvv


if __name__ == "__main__":
    num_nodes, node_size = 16, 32
    num_edges, edge_size = 32, 16
    cutoff = 5.0

    key = jax.random.PRNGKey(0)
    ks = jax.random.split(key, 12)

    # deterministic "checkpoint"
    params = {
        "w1": jax.random.normal(ks[0], (node_size, node_size), jnp.float32) / math.sqrt(node_size),
        "b1": 0.01 * jax.random.normal(ks[1], (1, node_size), jnp.float32),
        "w2": jax.random.normal(ks[2], (node_size, 3 * node_size), jnp.float32) / math.sqrt(node_size),
        "b2": 0.01 * jax.random.normal(ks[3], (1, 3 * node_size), jnp.float32),
        "wf": jax.random.normal(ks[4], (edge_size, 3 * node_size), jnp.float32) / math.sqrt(edge_size),
        "bf": 0.01 * jax.random.normal(ks[5], (1, 3 * node_size), jnp.float32),
    }

    node_state_scalar = jax.random.normal(ks[6], (num_nodes, node_size), jnp.float32)
    node_state_vector = jax.random.normal(ks[7], (num_nodes, 3, node_size), jnp.float32)
    edge_state = jax.random.normal(ks[8], (num_edges, edge_size), jnp.float32)
    edge_vector = 2.0 * jax.random.normal(ks[9], (num_edges, 3), jnp.float32)
    edge_distance = jnp.linalg.norm(edge_vector, axis=1, keepdims=True)
    edges = jax.random.randint(ks[10], (num_edges, 2), 0, num_nodes, jnp.int32)

    out_s, out_v = painn_interaction(node_state_scalar, node_state_vector, edge_state,
                                     edge_vector, edge_distance, edges, params, cutoff)
    jax.block_until_ready((out_s, out_v))

    ref_s, ref_v = painn_reference(node_state_scalar, node_state_vector, edge_state,
                                   edge_vector, edge_distance, edges, params, cutoff)
    # bf16 MXU operands (review-recommended) lose ~3 decimal digits on the gathered
    # node features, so the comparison against the pure-f32 reference is loosened.
    assert jnp.allclose(out_s, ref_s, atol=5e-2, rtol=5e-2), "scalar mismatch"
    assert jnp.allclose(out_v, ref_v, atol=5e-2, rtol=5e-2), "vector mismatch"

    print("KERNEL_OK")
</pallas_src>

<mosaic_0001>
module attributes {stable_mosaic.version = 11 : i64} {
  func.func @_node_mlp_kernel(%arg0: i32, %arg1: memref<16x32xf32, #tpu.memory_space<vmem>>, %arg2: memref<32x32xf32, #tpu.memory_space<vmem>>, %arg3: memref<1x32xf32, #tpu.memory_space<vmem>>, %arg4: memref<32x256xf32, #tpu.memory_space<vmem>>, %arg5: memref<1x256xf32, #tpu.memory_space<vmem>>, %arg6: memref<16x256xf32, #tpu.memory_space<vmem>>) attributes {dimension_semantics = [#tpu.dimension_semantics<parallel>], iteration_bounds = array<i64: 1>, scalar_prefetch = 0 : i64, scratch_operands = 0 : i64, tpu.core_type = #tpu.core_type<tc>, window_params = [{transform_indices = @transform_0, window_bounds = array<i64: 16, 32>}, {pipeline_mode = #tpu.pipeline_mode<synchronous>, transform_indices = @transform_1, window_bounds = array<i64: 32, 32>}, {pipeline_mode = #tpu.pipeline_mode<synchronous>, transform_indices = @transform_2, window_bounds = array<i64: 1, 32>}, {pipeline_mode = #tpu.pipeline_mode<synchronous>, transform_indices = @transform_3, window_bounds = array<i64: 32, 256>}, {pipeline_mode = #tpu.pipeline_mode<synchronous>, transform_indices = @transform_4, window_bounds = array<i64: 1, 256>}, {transform_indices = @transform_5, window_bounds = array<i64: 16, 256>}]} {
    %c0 = arith.constant 0 : index
    %c0_0 = arith.constant 0 : index
    %0 = vector.load %arg1[%c0, %c0_0] : memref<16x32xf32, #tpu.memory_space<vmem>>, vector<16x32xf32>
    %c0_1 = arith.constant 0 : index
    %c0_2 = arith.constant 0 : index
    %1 = vector.load %arg2[%c0_1, %c0_2] : memref<32x32xf32, #tpu.memory_space<vmem>>, vector<32x32xf32>
    %cst = arith.constant dense<0.000000e+00> : vector<16x32xf32>
    %2 = tpu.matmul %0, %1, %cst {dimension_numbers = #tpu.dot_dimension_numbers<[1], [0], [0], [1], [0, 0, 1, 1], [], []>} : vector<16x32xf32>, vector<32x32xf32>, vector<16x32xf32> -> vector<16x32xf32>
    %c0_3 = arith.constant 0 : index
    %c0_4 = arith.constant 0 : index
    %3 = vector.load %arg3[%c0_3, %c0_4] : memref<1x32xf32, #tpu.memory_space<vmem>>, vector<1x32xf32>
    %4 = vector.broadcast %3 : vector<1x32xf32> to vector<16x32xf32>
    %5 = arith.addf %2, %4 : vector<16x32xf32>
    %6 = arith.negf %5 : vector<16x32xf32>
    %7 = math.exp %6 : vector<16x32xf32>
    %cst_5 = arith.constant 1.000000e+00 : f32
    %8 = vector.broadcast %cst_5 : f32 to vector<16x32xf32>
    %9 = arith.addf %8, %7 : vector<16x32xf32>
    %10 = arith.divf %8, %9 : vector<16x32xf32>
    %11 = arith.mulf %5, %10 : vector<16x32xf32>
    %c0_6 = arith.constant 0 : index
    %c0_7 = arith.constant 0 : index
    %12 = vector.load %arg4[%c0_6, %c0_7] : memref<32x256xf32, #tpu.memory_space<vmem>>, vector<32x256xf32>
    %cst_8 = arith.constant dense<0.000000e+00> : vector<16x256xf32>
    %13 = tpu.matmul %11, %12, %cst_8 {dimension_numbers = #tpu.dot_dimension_numbers<[1], [0], [0], [1], [0, 0, 1, 1], [], []>} : vector<16x32xf32>, vector<32x256xf32>, vector<16x256xf32> -> vector<16x256xf32>
    %c0_9 = arith.constant 0 : index
    %c0_10 = arith.constant 0 : index
    %14 = vector.load %arg5[%c0_9, %c0_10] : memref<1x256xf32, #tpu.memory_space<vmem>>, vector<1x256xf32>
    %15 = vector.broadcast %14 : vector<1x256xf32> to vector<16x256xf32>
    %16 = arith.addf %13, %15 : vector<16x256xf32>
    %c0_11 = arith.constant 0 : index
    %c0_12 = arith.constant 0 : index
    %17 = vector.load %arg6[%c0_11, %c0_12] : memref<16x256xf32, #tpu.memory_space<vmem>>, vector<16x256xf32>
    tpu.vector_store %arg6[%c0_11, %c0_12], %16 {strides = array<i32>} : memref<16x256xf32, #tpu.memory_space<vmem>>, vector<16x256xf32>,
    return
  }
  func.func @transform_0(%arg0: i32) -> (i32, i32) {
    %c0_i32 = arith.constant 0 : i32
    %c0_i32_0 = arith.constant 0 : i32
    return %arg0, %c0_i32 : i32, i32
  }
  func.func @transform_1(%arg0: i32) -> (i32, i32) {
    %c0_i32 = arith.constant 0 : i32
    %c0_i32_0 = arith.constant 0 : i32
    %c0_i32_1 = arith.constant 0 : i32
    return %c0_i32, %c0_i32_0 : i32, i32
  }
  func.func @transform_2(%arg0: i32) -> (i32, i32) {
    %c0_i32 = arith.constant 0 : i32
    %c0_i32_0 = arith.constant 0 : i32
    %c0_i32_1 = arith.constant 0 : i32
    return %c0_i32, %c0_i32_0 : i32, i32
  }
  func.func @transform_3(%arg0: i32) -> (i32, i32) {
    %c0_i32 = arith.constant 0 : i32
    %c0_i32_0 = arith.constant 0 : i32
    %c0_i32_1 = arith.constant 0 : i32
    return %c0_i32, %c0_i32_0 : i32, i32
  }
  func.func @transform_4(%arg0: i32) -> (i32, i32) {
    %c0_i32 = arith.constant 0 : i32
    %c0_i32_0 = arith.constant 0 : i32
    %c0_i32_1 = arith.constant 0 : i32
    return %c0_i32, %c0_i32_0 : i32, i32
  }
  func.func @transform_5(%arg0: i32) -> (i32, i32) {
    %c0_i32 = arith.constant 0 : i32
    %c0_i32_0 = arith.constant 0 : i32
    return %arg0, %c0_i32 : i32, i32
  }
}

</mosaic_0001>

<llo_original>
// kernel: tpu_custom_call.1
$region0: #{tpu_custom_call.1}
  #allocation0 [shape = 'u32[]', space=smem, size = 0x4, offset = 0x4, fixed_abs, tag = 'smem constant byte address 0x4 - core index']
  #allocation1 [shape = 'u32[144,128]{1,0:T(1,128)}', space=vmem, size = 0x12000, scoped, tag = 'internal scratch']
  %s0 = inlined_call_operand.hbm [shape: f32[16,32], index: 0, kind: input, shape index: {}]
  %s1 = inlined_call_operand.hbm [shape: f32[32,32], index: 1, kind: input, shape index: {}]
  %s2 = inlined_call_operand.vmem [shape: f32[1,32], index: 2, kind: input, shape index: {}]
  %s3 = inlined_call_operand.hbm [shape: f32[32,256], index: 3, kind: input, shape index: {}]
  %s4 = inlined_call_operand.vmem [shape: f32[1,256], index: 4, kind: input, shape index: {}]
  %s5 = inlined_call_operand.hbm [shape: f32[16,256], index: 5, kind: output, shape index: {}]
  %s6 = sld [smem:[#allocation0]]
  $region42: #{tpu_custom_call.1} parent=0
    _
  %s8 = ssub.s32 1, %s6
  %s9 = scalar_select 0, %s8, %s6
  $region1: #{tpu_custom_call.1} parent=0
    #allocation2 [shape = 'u8[8192]{0}', space=vmem, size = 0x2000, scoped, tag = 'input window, operand 0, single buffered']
    #allocation3 [shape = 's32[1]{0}', space=sflag, size = 0x4, scoped, tag = 'scoped memory for tpu_custom_call.1']
    #allocation4 [shape = 's32[1]{0}', space=sflag, size = 0x4, scoped, tag = 'scoped memory for tpu_custom_call.1']
    #allocation5 [shape = 'u8[16384]{0}', space=vmem, size = 0x4000, scoped, tag = 'input window, operand 1, single buffered']
    #allocation6 [shape = 's32[1]{0}', space=sflag, size = 0x4, scoped, tag = 'scoped memory for tpu_custom_call.1']
    #allocation7 [shape = 'u8[32768]{0}', space=vmem, size = 0x8000, scoped, tag = 'input window, operand 3, single buffered']
    #allocation8 [shape = 'u8[16384]{0}', space=vmem, size = 0x4000, scoped, tag = 'output window, operand 0, single buffered']
    %10 = vsyncpa [#allocation3], 0
    %11 = vsyncpa [#allocation6], 0
    %12 = vsyncpa [#allocation4], 0
    // Predicated region
    $region2: #{tpu_custom_call.1} parent=1 // pred_check
      _
    $region3: #{tpu_custom_call.1} parent=1 // pred_check_branch
      %14 = sbr.rel (0) target = $region5
    $region4: #{tpu_custom_call.1} parent=1 // pred_region
      %s16 = ssub.s32 256, 256
      %17 = vsyncadd [#allocation3], %s16
      %s18 = sshll.u32 [#allocation2], 4
      %s19 = int_to_ptr.vmem [resolvable:$true] %s18
      %24 = dma.hbm_to_vmem [thread:$0]  %s0, 256, %s19, [#allocation3], 128, 128, 8
    $region5: #{tpu_custom_call.1} parent=1 // pred_fallthru
      _
    // Predicated region
    $region6: #{tpu_custom_call.1} parent=1 // pred_check
      _
    $region7: #{tpu_custom_call.1} parent=1 // pred_check_branch
      %26 = sbr.rel (0) target = $region9
    $region8: #{tpu_custom_call.1} parent=1 // pred_region
      %s28 = ssub.s32 512, 512
      %29 = vsyncadd [#allocation6], %s28
      %s30 = sshll.u32 [#allocation5], 4
      %s31 = int_to_ptr.vmem [resolvable:$true] %s30
      %36 = dma.hbm_to_vmem [thread:$0]  %s1, 512, %s31, [#allocation6], 128, 128, 8
    $region9: #{tpu_custom_call.1} parent=1 // pred_fallthru
      _
    // Predicated region
    $region10: #{tpu_custom_call.1} parent=1 // pred_check
      _
    $region11: #{tpu_custom_call.1} parent=1 // pred_check_branch
      %38 = sbr.rel (0) target = $region13
    $region12: #{tpu_custom_call.1} parent=1 // pred_region
      _
    $region13: #{tpu_custom_call.1} parent=1 // pred_fallthru
      _
    // Predicated region
    $region14: #{tpu_custom_call.1} parent=1 // pred_check
      _
    $region15: #{tpu_custom_call.1} parent=1 // pred_check_branch
      %40 = sbr.rel (0) target = $region17
    $region16: #{tpu_custom_call.1} parent=1 // pred_region
      %s42 = ssub.s32 1024, 1024
      %43 = vsyncadd [#allocation6], %s42
      %s44 = sshll.u32 [#allocation7], 4
      %s45 = int_to_ptr.vmem [resolvable:$true] %s44
      %50 = dma.hbm_to_vmem [thread:$0]  %s3, 1024, %s45, [#allocation6], 256, 256, 16
    $region17: #{tpu_custom_call.1} parent=1 // pred_fallthru
      _
    // Predicated region
    $region18: #{tpu_custom_call.1} parent=1 // pred_check
      _
    $region19: #{tpu_custom_call.1} parent=1 // pred_check_branch
      %52 = sbr.rel (0) target = $region21
    $region20: #{tpu_custom_call.1} parent=1 // pred_region
      _
    $region21: #{tpu_custom_call.1} parent=1 // pred_fallthru
      _
    // Predicated region
    $region22: #{tpu_custom_call.1} parent=1 // pred_check
      _
    $region23: #{tpu_custom_call.1} parent=1 // pred_check_branch
      %54 = sbr.rel (0) target = $region25
    $region24: #{tpu_custom_call.1} parent=1 // pred_region
      %55 = dma.done [#allocation3], 256
    $region25: #{tpu_custom_call.1} parent=1 // pred_fallthru
      _
    // Predicated region
    $region26: #{tpu_custom_call.1} parent=1 // pred_check
      _
    $region27: #{tpu_custom_call.1} parent=1 // pred_check_branch
      %57 = sbr.rel (0) target = $region29
    $region28: #{tpu_custom_call.1} parent=1 // pred_region
      %58 = dma.done [#allocation6], 512
    $region29: #{tpu_custom_call.1} parent=1 // pred_fallthru
      _
    // Predicated region
    $region30: #{tpu_custom_call.1} parent=1 // pred_check
      _
    $region31: #{tpu_custom_call.1} parent=1 // pred_check_branch
      %60 = sbr.rel (0) target = $region33
    $region32: #{tpu_custom_call.1} parent=1 // pred_region
      %61 = dma.done [#allocation6], 1024
    $region33: #{tpu_custom_call.1} parent=1 // pred_fallthru
      _
    %v62 = vld [vmem:[#allocation2] sm:$0xff]
    %v63 = vld [vmem:[#allocation2 + $0x8] sm:$0xff]
    %v64 = vld [vmem:[#allocation5] sm:$0xff]
    %v65 = vld [vmem:[#allocation5 + $0x8] sm:$0xff]
    %v66 = vld [vmem:[#allocation5 + $0x10] sm:$0xff]
    %v67 = vld [vmem:[#allocation5 + $0x18] sm:$0xff]
    %v68 = vld [vmem:[%s2] sm:$0x1]
    %v70 = vlaneseq
    %v71 = vshrl.u32 %v70, 7
    %v72 = vsub.s32 0, %v71
    %v73 = vrot.slane %v68, %v72
    %vm75 = vcmask 261120
    %v77 = vsel %vm75, %v62, 0
    %v80 = vsel %vm75, %v63, 0
    %82 = vmatprep.subr.mxu0 0.0
    %83 = vmatpush1.msra.mxu0 %v64
    %84 = vmatprep.subr.mxu0 0.0
    %85 = vmatpush1.msra.mxu0 %v65
    %86 = vmatprep.subr.mxu0 0.0
    %87 = vmatpush1.msra.mxu0 %v66
    %88 = vmatprep.subr.mxu0 0.0
    %89 = vmatpush1.msra.mxu0 %v67
    %90 = vmatprep.subr.mxu0 0.0
    %91 = vmatpush1.msra.mxu0 0.0
    %92 = vmatprep.subr.mxu0 0.0
    %93 = vmatpush1.msra.mxu0 0.0
    %94 = vmatprep.subr.mxu0 0.0
    %95 = vmatpush1.msra.mxu0 0.0
    %96 = vmatprep.subr.mxu0 0.0
    %97 = vmatpush1.msra.mxu0 0.0
    %98 = vmatprep.subr.mxu0 0.0
    %99 = vmatpush1.msra.mxu0 0.0
    %100 = vmatprep.subr.mxu0 0.0
    %101 = vmatpush1.msra.mxu0 0.0
    %102 = vmatprep.subr.mxu0 0.0
    %103 = vmatpush1.msra.mxu0 0.0
    %104 = vmatprep.subr.mxu0 0.0
    %105 = vmatpush1.msra.mxu0 0.0
    %106 = vmatprep.subr.mxu0 0.0
    %107 = vmatpush1.msra.mxu0 0.0
    %108 = vmatprep.subr.mxu0 0.0
    %109 = vmatpush1.msra.mxu0 0.0
    %110 = vmatprep.subr.mxu0 0.0
    %111 = vmatpush1.msra.mxu0 0.0
    %112 = vmatprep.subr.mxu0 0.0
    %113 = vmatpush1.msra.mxu0 0.0
    %114 = vmatprep.subr.mxu0 0.0
    %115 = vmatpush1.msra.mxu0 0.0
    %116 = vmatprep.subr.mxu0 0.0
    %117 = vmatpush1.msra.mxu0 0.0
    %118 = vmatprep.subr.mxu0 0.0
    %119 = vmatpush1.msra.mxu0 0.0
    %120 = vmatprep.subr.mxu0 0.0
    %121 = vmatpush1.msra.mxu0 0.0
    %122 = vmatprep.subr.mxu0 0.0
    %123 = vmatpush1.msra.mxu0 0.0
    %124 = vmatprep.subr.mxu0 0.0
    %125 = vmatpush1.msra.mxu0 0.0
    %126 = vmatprep.subr.mxu0 0.0
    %127 = vmatpush1.msra.mxu0 0.0
    %128 = vmatprep.subr.mxu0 0.0
    %129 = vmatpush1.msra.mxu0 0.0
    %130 = vmatprep.subr.mxu0 0.0
    %131 = vmatpush1.msra.mxu0 0.0
    %132 = vmatprep.subr.mxu0 0.0
    %133 = vmatpush1.msra.mxu0 0.0
    %134 = vmatprep.subr.mxu0 0.0
    %135 = vmatpush1.msra.mxu0 0.0
    %136 = vmatprep.subr.mxu0 0.0
    %137 = vmatpush1.msra.mxu0 0.0
    %138 = vmatprep.subr.mxu0 0.0
    %139 = vmatpush1.msra.mxu0 0.0
    %140 = vmatprep.subr.mxu0 0.0
    %141 = vmatpush1.msra.mxu0 0.0
    %142 = vmatprep.subr.mxu0 0.0
    %143 = vmatpush1.msra.mxu0 0.0
    %144 = vmatprep.subr.mxu0 0.0
    %145 = vmatpush1.msra.mxu0 0.0
    %146 = vmatprep.mubr.f32.mxu0 0.0
    %147 = vmatmul.mubr.f32.gmra.mrb[0].mxu0 %v77
    %v148 = vpop.f32.mrb[0].mxu0
    %v149 = vadd.f32 %v73, %v148
    %v150 = vpop.f32.mrb[0].mxu0
    %151 = vmatprep.mubr.f32.mxu0 0.0
    %152 = vmatmul.mubr.f32.gmra.mrb[0].mxu0 %v80
    %v153 = vpop.f32.mrb[0].mxu0
    %v154 = vadd.f32 %v73, %v153
    %v155 = vpop.f32.mrb[0].mxu0
    %156 = vdwg.mxu0
    %v157 = vxor.u32 %v149, 2147483648
    %v158 = vxor.u32 %v154, 2147483648
    %v159 = vmul.f32 %v157, 1.442695
    %v160 = vpow.pop %v159
    %v161 = vmul.f32 %v158, 1.442695
    %v162 = vpow.pop %v161
    %v163 = vadd.f32 %v160, 1.0
    %v164 = vadd.f32 %v162, 1.0
    %v165 = vrcp.pop %v163
    %v166 = vmul.f32 1.0, %v165
    %v167 = vrcp.pop %v164
    %v168 = vmul.f32 1.0, %v167
    %v169 = vmul.f32 %v149, %v166
    %v170 = vmul.f32 %v154, %v168
    %v171 = vld [vmem:[#allocation7] sm:$0xff]
    %v172 = vld [vmem:[#allocation7 + $0x8] sm:$0xff]
    %v173 = vld [vmem:[#allocation7 + $0x10] sm:$0xff]
    %v174 = vld [vmem:[#allocation7 + $0x18] sm:$0xff]
    %v175 = vld [vmem:[#allocation7 + $0x20] sm:$0xff]
    %v176 = vld [vmem:[#allocation7 + $0x28] sm:$0xff]
    %v177 = vld [vmem:[#allocation7 + $0x30] sm:$0xff]
    %v178 = vld [vmem:[#allocation7 + $0x38] sm:$0xff]
    %v179 = vld [vmem:[%s4] sm:$0x3]
    %v181 = vlaneseq
    %v182 = vshrl.u32 %v181, 7
    %v183 = vsub.s32 0, %v182
    %v184 = vrot.slane %v179, %v183
    %v185 = vlaneseq
    %v186 = vshrl.u32 %v185, 7
    %v187 = vsub.s32 1, %v186
    %v188 = vrot.slane %v179, %v187
    %v192 = vsel %vm75, %v169, 0
    %v195 = vsel %vm75, %v170, 0
    %197 = vmatprep.subr.mxu0 %v172
    %198 = vmatpush1.msra.mxu0 %v171
    %199 = vmatprep.subr.mxu0 %v174
    %200 = vmatpush1.msra.mxu0 %v173
    %201 = vmatprep.subr.mxu0 %v176
    %202 = vmatpush1.msra.mxu0 %v175
    %203 = vmatprep.subr.mxu0 %v178
    %204 = vmatpush1.msra.mxu0 %v177
    %205 = vmatprep.subr.mxu0 0.0
    %206 = vmatpush1.msra.mxu0 0.0
    %207 = vmatprep.subr.mxu0 0.0
    %208 = vmatpush1.msra.mxu0 0.0
    %209 = vmatprep.subr.mxu0 0.0
    %210 = vmatpush1.msra.mxu0 0.0
    %211 = vmatprep.subr.mxu0 0.0
    %212 = vmatpush1.msra.mxu0 0.0
    %213 = vmatprep.subr.mxu0 0.0
    %214 = vmatpush1.msra.mxu0 0.0
    %215 = vmatprep.subr.mxu0 0.0
    %216 = vmatpush1.msra.mxu0 0.0
    %217 = vmatprep.subr.mxu0 0.0
    %218 = vmatpush1.msra.mxu0 0.0
    %219 = vmatprep.subr.mxu0 0.0
    %220 = vmatpush1.msra.mxu0 0.0
    %221 = vmatprep.subr.mxu0 0.0
    %222 = vmatpush1.msra.mxu0 0.0
    %223 = vmatprep.subr.mxu0 0.0
    %224 = vmatpush1.msra.mxu0 0.0
    %225 = vmatprep.subr.mxu0 0.0
    %226 = vmatpush1.msra.mxu0 0.0
    %227 = vmatprep.subr.mxu0 0.0
    %228 = vmatpush1.msra.mxu0 0.0
    %229 = vmatprep.subr.mxu0 0.0
    %230 = vmatpush1.msra.mxu0 0.0
    %231 = vmatprep.subr.mxu0 0.0
    %232 = vmatpush1.msra.mxu0 0.0
    %233 = vmatprep.subr.mxu0 0.0
    %234 = vmatpush1.msra.mxu0 0.0
    %235 = vmatprep.subr.mxu0 0.0
    %236 = vmatpush1.msra.mxu0 0.0
    %237 = vmatprep.subr.mxu0 0.0
    %238 = vmatpush1.msra.mxu0 0.0
    %239 = vmatprep.subr.mxu0 0.0
    %240 = vmatpush1.msra.mxu0 0.0
    %241 = vmatprep.subr.mxu0 0.0
    %242 = vmatpush1.msra.mxu0 0.0
    %243 = vmatprep.subr.mxu0 0.0
    %244 = vmatpush1.msra.mxu0 0.0
    %245 = vmatprep.subr.mxu0 0.0
    %246 = vmatpush1.msra.mxu0 0.0
    %247 = vmatprep.subr.mxu0 0.0
    %248 = vmatpush1.msra.mxu0 0.0
    %249 = vmatprep.subr.mxu0 0.0
    %250 = vmatpush1.msra.mxu0 0.0
    %251 = vmatprep.subr.mxu0 0.0
    %252 = vmatpush1.msra.mxu0 0.0
    %253 = vmatprep.subr.mxu0 0.0
    %254 = vmatpush1.msra.mxu0 0.0
    %255 = vmatprep.subr.mxu0 0.0
    %256 = vmatpush1.msra.mxu0 0.0
    %257 = vmatprep.subr.mxu0 0.0
    %258 = vmatpush1.msra.mxu0 0.0
    %259 = vmatprep.subr.mxu0 0.0
    %260 = vmatpush1.msra.mxu0 0.0
    %261 = vmatprep.mubr.f32.mxu0 0.0
    %262 = vmatmul.mubr.f32.gmra.mrb[0].mxu0 %v192
    %v263 = vpop.f32.mrb[0].mxu0
    %v264 = vadd.f32 %v184, %v263
    %v265 = vpop.f32.mrb[0].mxu0
    %v266 = vadd.f32 %v188, %v265
    %267 = vmatprep.mubr.f32.mxu0 0.0
    %268 = vmatmul.mubr.f32.gmra.mrb[0].mxu0 %v195
    %v269 = vpop.f32.mrb[0].mxu0
    %v270 = vadd.f32 %v184, %v269
    %v271 = vpop.f32.mrb[0].mxu0
    %v272 = vadd.f32 %v188, %v271
    %273 = vdwg.mxu0
    %274 = vst [vmem:[#allocation8] sm:$0xff] %v264
    %275 = vst [vmem:[#allocation8 + $0x8] sm:$0xff] %v266
    %276 = vst [vmem:[#allocation8 + $0x10] sm:$0xff] %v270
    %277 = vst [vmem:[#allocation8 + $0x18] sm:$0xff] %v272
    // Predicated region
    $region34: #{tpu_custom_call.1} parent=1 // pred_check
      _
    $region35: #{tpu_custom_call.1} parent=1 // pred_check_branch
      %279 = sbr.rel (0) target = $region37
    $region36: #{tpu_custom_call.1} parent=1 // pred_region
      %s281 = ssub.s32 512, 512
      %282 = vsyncadd [#allocation4], %s281
      %s283 = sshll.u32 [#allocation8], 4
      %s284 = int_to_ptr.vmem [resolvable:$true] %s283
      %289 = dma.vmem_to_hbm [thread:$0]  %s284, 512, %s5, [#allocation4], 256, 256, 16
    $region37: #{tpu_custom_call.1} parent=1 // pred_fallthru
      _
    // Predicated region
    $region38: #{tpu_custom_call.1} parent=1 // pred_check
      _
    $region39: #{tpu_custom_call.1} parent=1 // pred_check_branch
      %291 = sbr.rel (0) target = $region41
    $region40: #{tpu_custom_call.1} parent=1 // pred_region
      %292 = dma.done [#allocation4], 512
    $region41: #{tpu_custom_call.1} parent=1 // pred_fallthru
      _
    %293 = vsyncpa [#allocation3], 1
    %294 = vsyncpa [#allocation6], 1
    %295 = vsyncpa [#allocation4], 1

</llo_original>
